<compile_context>
chip_gen: v7x
topology: tpu7x:2x2x1
jax: 0.10.0
libtpu: 0.0.40
codegen_flags: <defaults>
</compile_context>

<pallas_src>
import functools

import jax
import jax.numpy as jnp
from jax.experimental import pallas as pl
from jax.experimental.pallas import tpu as pltpu


def _round_up(x, m):
    return ((x + m - 1) // m) * m


def _gdo_kernel(adj_ref, feat_ref, feat_aug_ref, wcat_ref, w1t_ref,
                b1_ref, b2_ref, out_ref, acc_ref):
    k = pl.program_id(1)
    d = feat_ref.shape[1]        # input feature dim (unpadded)
    h = out_ref.shape[1]         # padded hidden size (multiple of 128)

    @pl.when(k == 0)
    def _():
        acc_ref[...] = jnp.zeros_like(acc_ref)

    # int8 0/1 adjacency -> bf16 right before the MXU (VPU convert hides under
    # the DMA of the next adj block).  One bf16 MXU pass gives both the tail
    # aggregation (adj @ feat) and the row sum (extra ones column).
    adj = adj_ref[...].astype(jnp.bfloat16)                    # [TM, TK]
    acc_ref[...] += jnp.dot(adj, feat_aug_ref[...],
                            preferred_element_type=jnp.float32)  # [TM, D+1]

    @pl.when(k == pl.num_programs(1) - 1)
    def _():
        tail_ext = acc_ref[...]                                # [adj@feat | rowsum]
        rowsum = tail_ext[:, d:]                               # [TM, 1], exact int
        # 0/1 adjacency: max(adj, -1) == (rowsum > 0), so
        # denom = rowsum + (1 - mask) == where(rowsum > 0, rowsum, 1).
        denom = jnp.where(rowsum > 0.0, rowsum, 1.0)
        inv_denom = pl.reciprocal(denom, approx=True)          # EUP, ~free

        feat = feat_ref[...]                                   # [TM, D] f32
        # Fused feat-side matmul: [feat @ W1_head | feat @ W2] in one MXU pass.
        p = jnp.dot(feat, wcat_ref[...],
                    preferred_element_type=jnp.float32)        # [TM, 2*h]
        p_head = p[:, :h]                                      # feat @ W1_head
        p_out = p[:, h:]                                       # feat @ W2

        # (rowsum * feat) @ W1_head == rowsum * (feat @ W1_head); tail_ext's
        # extra rowsum column is annihilated by the appended zero row of w1t.
        neigh_raw = rowsum * p_head + jnp.dot(
            tail_ext, w1t_ref[...], preferred_element_type=jnp.float32)
        neigh = neigh_raw * inv_denom + b1_ref[...]
        out_ref[...] = jnp.tanh((p_out + b2_ref[...]) - neigh).astype(out_ref.dtype)
    # TODO(synk): nn.Dropout is identity in eval mode; training-mode dropout
    # (pltpu.prng_*) intentionally omitted.


def _pad2d(x, rows, cols, dtype):
    """Single fused pad+cast materialization (no intermediate full copy)."""
    x = x.astype(dtype)
    if x.shape == (rows, cols):
        return x
    return jnp.zeros((rows, cols), dtype).at[:x.shape[0], :x.shape[1]].set(x)


@functools.partial(jax.jit, static_argnames=())
def graph_distill_operator(features, adj_matrix, params):
    """features: [N, D] f32, adj_matrix: [N, N] 0/1; returns (updated, updated)."""
    N, D = features.shape
    w1, b1, w2, b2 = params["w1"], params["b1"], params["w2"], params["b2"]
    H = w2.shape[1]

    # ---- tiling / padding choices (plain-JAX glue) --------------------------
    H_pad = _round_up(H, 128)                 # lane-dense outputs
    TM = min(256, _round_up(N, 32))           # row tile (int8 sublane tile = 32)
    TK = min(2048, _round_up(N, 128))         # neighbor/K tile (lane tile = 128)
    N_pad_r = _round_up(N, TM)
    N_pad_c = _round_up(N, TK)
    grid = (N_pad_r // TM, N_pad_c // TK)

    # Adjacency streamed as int8 (0/1 is exact); fused pad + cast, no f32
    # N_pad^2 intermediate.  If the graph is reused across calls, pre-convert
    # and pass it in already padded/int8 to skip even this.
    # TODO(synk): weighted (non-0/1) adjacency needs a bf16/f32 adj stream and
    # the original max-based mask; this kernel assumes a binary adjacency.
    adj_i8 = _pad2d(adj_matrix, N_pad_r, N_pad_c, jnp.int8)

    feat_f32 = features.astype(jnp.float32)
    feat_p = _pad2d(feat_f32, N_pad_r, D, jnp.float32)

    # feat + ones column (MXU rowsum), bf16 operand of the adj matmul,
    # blocked along the neighbor (K) axis.
    feat_aug = jnp.concatenate(
        [feat_f32, jnp.ones((N, 1), jnp.float32)], axis=1)
    feat_aug = _pad2d(feat_aug, N_pad_c, D + 1, jnp.bfloat16)

    # Weight prep: split distill_dence into head/tail halves, pad H -> H_pad.
    def pad_h(m):
        return _pad2d(m, m.shape[0], H_pad, jnp.float32)

    wcat = jnp.concatenate([pad_h(w1[:D, :]), pad_h(w2)], axis=1)        # [D, 2*H_pad]
    w1t_aug = jnp.concatenate(
        [pad_h(w1[D:, :]), jnp.zeros((1, H_pad), jnp.float32)], axis=0)  # [D+1, H_pad]
    b1_p = pad_h(b1.reshape(1, H))
    b2_p = pad_h(b2.reshape(1, H))

    # Explicit VMEM budget (double-buffered pipelined operands + scratch).
    def buf_bytes(rows, cols, itemsize, sub):
        return _round_up(rows, sub) * _round_up(cols, 128) * itemsize

    vmem_bytes = (
        2 * buf_bytes(TM, TK, 1, 32)            # adj (int8)
        + 2 * buf_bytes(TM, D, 4, 8)            # feat rows
        + 2 * buf_bytes(TK, D + 1, 2, 16)       # feat + ones (bf16)
        + 2 * buf_bytes(D, 2 * H_pad, 4, 8)     # [W1_head | W2]
        + 2 * buf_bytes(D + 1, H_pad, 4, 8)     # W1_tail (+ zero row)
        + 4 * buf_bytes(1, H_pad, 4, 8)         # b1, b2
        + 2 * buf_bytes(TM, H_pad, 4, 8)        # out
        + buf_bytes(TM, D + 1, 4, 8))           # accumulator scratch
    vmem_limit = int(min(64 * 2**20, max(16 * 2**20, 2 * vmem_bytes)))
    # TODO(synk): on v7x, single-buffer the grid-invariant operands
    # (pipeline_mode=pl.Buffered(1)) to buy back tile width within 64 MiB VMEM.

    out = pl.pallas_call(
        _gdo_kernel,
        out_shape=jax.ShapeDtypeStruct((N_pad_r, H_pad), jnp.float32),
        grid_spec=pltpu.PrefetchScalarGridSpec(
            num_scalar_prefetch=0,
            grid=grid,
            in_specs=[
                pl.BlockSpec((TM, TK), lambda i, k: (i, k)),         # adj (int8)
                pl.BlockSpec((TM, D), lambda i, k: (i, 0)),          # feat rows (f32)
                pl.BlockSpec((TK, D + 1), lambda i, k: (k, 0)),      # feat+ones (bf16)
                pl.BlockSpec((D, 2 * H_pad), lambda i, k: (0, 0)),   # [W1_head | W2]
                pl.BlockSpec((D + 1, H_pad), lambda i, k: (0, 0)),   # W1_tail (+zero row)
                pl.BlockSpec((1, H_pad), lambda i, k: (0, 0)),       # b1
                pl.BlockSpec((1, H_pad), lambda i, k: (0, 0)),       # b2
            ],
            out_specs=pl.BlockSpec((TM, H_pad), lambda i, k: (i, 0)),
            scratch_shapes=[pltpu.VMEM((TM, D + 1), jnp.float32)]),
        compiler_params=pltpu.CompilerParams(
            dimension_semantics=("parallel", "arbitrary"),
            vmem_limit_bytes=vmem_limit),
    )(adj_i8, feat_p, feat_aug, wcat, w1t_aug, b1_p, b2_p)

    out = out[:N, :H]
    return out, out


def init_params(key, input_dim, hidden_size):
    """Deterministic synthetic parameters matching the module's __init__ shapes."""
    k1, k2, k3, k4 = jax.random.split(key, 4)
    scale1 = 1.0 / jnp.sqrt(2.0 * input_dim)
    scale2 = 1.0 / jnp.sqrt(float(input_dim))
    return {
        # distill_dence: Linear(2*D -> H), stored as (2D, H) so kernel does x@W+b
        "w1": jax.random.uniform(k1, (2 * input_dim, hidden_size),
                                 jnp.float32, -scale1, scale1),
        "b1": jax.random.uniform(k2, (hidden_size,), jnp.float32,
                                 -scale1, scale1),
        # distill_out_dence: Linear(D -> H), stored as (D, H)
        "w2": jax.random.uniform(k3, (input_dim, hidden_size),
                                 jnp.float32, -scale2, scale2),
        "b2": jax.random.uniform(k4, (hidden_size,), jnp.float32,
                                 -scale2, scale2),
    }


if __name__ == "__main__":
    key = jax.random.PRNGKey(0)
    k_feat, k_adj, k_param = jax.random.split(key, 3)

    N, D, H = 8, 16, 32  # node_num, input_dim, config.net.hidden_size

    features = jax.random.normal(k_feat, (N, D), jnp.float32)
    # 0/1 adjacency with possible isolated nodes
    adj = (jax.random.uniform(k_adj, (N, N)) > 0.6).astype(jnp.float32)

    params = init_params(k_param, D, H)

    updated, updated2 = graph_distill_operator(features, adj, params)
    jax.block_until_ready(updated)

    # pure-JAX f32 reference (kernel runs the adj path in bf16 + approx recip,
    # hence the slightly relaxed tolerance)
    rowsum = adj.sum(-1, keepdims=True)
    mask = adj.max(-1, keepdims=True)
    denom = rowsum + (1.0 - mask)
    ave = jnp.concatenate([rowsum * features, adj @ features], axis=-1) / denom
    ref = jnp.tanh((features @ params["w2"] + params["b2"])
                   - (ave @ params["w1"] + params["b1"]))

    assert updated.shape == (N, H)
    assert jnp.allclose(updated, ref, atol=3e-2, rtol=3e-2), "mismatch vs reference"
    assert jnp.allclose(updated, updated2), "tuple outputs must match"

    print("KERNEL_OK")
</pallas_src>

<mosaic_0001>
module attributes {stable_mosaic.version = 11 : i64} {
  func.func @_gdo_kernel(%arg0: i32, %arg1: i32, %arg2: memref<32x128xi8, #tpu.memory_space<vmem>>, %arg3: memref<32x16xf32, #tpu.memory_space<vmem>>, %arg4: memref<128x17xbf16, #tpu.memory_space<vmem>>, %arg5: memref<16x256xf32, #tpu.memory_space<vmem>>, %arg6: memref<17x128xf32, #tpu.memory_space<vmem>>, %arg7: memref<1x128xf32, #tpu.memory_space<vmem>>, %arg8: memref<1x128xf32, #tpu.memory_space<vmem>>, %arg9: memref<32x128xf32, #tpu.memory_space<vmem>>, %arg10: memref<32x17xf32, #tpu.memory_space<vmem>>) attributes {dimension_semantics = [#tpu.dimension_semantics<parallel>, #tpu.dimension_semantics<arbitrary>], iteration_bounds = array<i64: 1, 1>, scalar_prefetch = 0 : i64, scratch_operands = 1 : i64, tpu.core_type = #tpu.core_type<tc>, window_params = [{transform_indices = @transform_0, window_bounds = array<i64: 32, 128>}, {transform_indices = @transform_1, window_bounds = array<i64: 32, 16>}, {transform_indices = @transform_2, window_bounds = array<i64: 128, 17>}, {pipeline_mode = #tpu.pipeline_mode<synchronous>, transform_indices = @transform_3, window_bounds = array<i64: 16, 256>}, {pipeline_mode = #tpu.pipeline_mode<synchronous>, transform_indices = @transform_4, window_bounds = array<i64: 17, 128>}, {pipeline_mode = #tpu.pipeline_mode<synchronous>, transform_indices = @transform_5, window_bounds = array<i64: 1, 128>}, {pipeline_mode = #tpu.pipeline_mode<synchronous>, transform_indices = @transform_6, window_bounds = array<i64: 1, 128>}, {transform_indices = @transform_7, window_bounds = array<i64: 32, 128>}]} {
    %c0_i32 = arith.constant 0 : i32
    %0 = arith.cmpi eq, %arg1, %c0_i32 : i32
    %1 = arith.extui %0 : i1 to i32
    %c0_i32_0 = arith.constant 0 : i32
    %2 = arith.cmpi ne, %1, %c0_i32_0 : i32
    scf.if %2 {
      %cst_10 = arith.constant 0.000000e+00 : f32
      %13 = vector.broadcast %cst_10 : f32 to vector<32x17xf32>
      %c0_11 = arith.constant 0 : index
      %c0_12 = arith.constant 0 : index
      %14 = vector.load %arg10[%c0_11, %c0_12] : memref<32x17xf32, #tpu.memory_space<vmem>>, vector<32x17xf32>
      tpu.vector_store %arg10[%c0_11, %c0_12], %13 {strides = array<i32>} : memref<32x17xf32, #tpu.memory_space<vmem>>, vector<32x17xf32>,
    } else {
    }
    %c0 = arith.constant 0 : index
    %c0_1 = arith.constant 0 : index
    %3 = vector.load %arg2[%c0, %c0_1] : memref<32x128xi8, #tpu.memory_space<vmem>>, vector<32x128xi8>
    %4 = arith.sitofp %3 : vector<32x128xi8> to vector<32x128xbf16>
    %c0_2 = arith.constant 0 : index
    %c0_3 = arith.constant 0 : index
    %5 = vector.load %arg10[%c0_2, %c0_3] : memref<32x17xf32, #tpu.memory_space<vmem>>, vector<32x17xf32>
    %c0_4 = arith.constant 0 : index
    %c0_5 = arith.constant 0 : index
    %6 = vector.load %arg4[%c0_4, %c0_5] : memref<128x17xbf16, #tpu.memory_space<vmem>>, vector<128x17xbf16>
    %cst = arith.constant dense<0.000000e+00> : vector<32x17xf32>
    %7 = tpu.matmul %4, %6, %cst {dimension_numbers = #tpu.dot_dimension_numbers<[1], [0], [0], [1], [0, 0, 1, 1], [], []>} : vector<32x128xbf16>, vector<128x17xbf16>, vector<32x17xf32> -> vector<32x17xf32>
    %8 = arith.addf %5, %7 : vector<32x17xf32>
    %c0_6 = arith.constant 0 : index
    %c0_7 = arith.constant 0 : index
    %9 = vector.load %arg10[%c0_6, %c0_7] : memref<32x17xf32, #tpu.memory_space<vmem>>, vector<32x17xf32>
    tpu.vector_store %arg10[%c0_6, %c0_7], %8 {strides = array<i32>} : memref<32x17xf32, #tpu.memory_space<vmem>>, vector<32x17xf32>,
    %c0_i32_8 = arith.constant 0 : i32
    %10 = arith.cmpi eq, %arg1, %c0_i32_8 : i32
    %11 = arith.extui %10 : i1 to i32
    %c0_i32_9 = arith.constant 0 : i32
    %12 = arith.cmpi ne, %11, %c0_i32_9 : i32
    scf.if %12 {
      %c0_10 = arith.constant 0 : index
      %c0_11 = arith.constant 0 : index
      %13 = vector.load %arg10[%c0_10, %c0_11] : memref<32x17xf32, #tpu.memory_space<vmem>>, vector<32x17xf32>
      %14 = vector.extract_strided_slice %13 {offsets = [0, 16], sizes = [32, 1], strides = [1, 1]} : vector<32x17xf32> to vector<32x1xf32>
      %cst_12 = arith.constant 0.000000e+00 : f32
      %15 = vector.broadcast %cst_12 : f32 to vector<32x1xf32>
      %16 = arith.cmpf ogt, %14, %15 : vector<32x1xf32>
      %cst_13 = arith.constant 1.000000e+00 : f32
      %17 = vector.broadcast %cst_13 : f32 to vector<32x1xf32>
      %18 = arith.select %16, %14, %17 : vector<32x1xi1>, vector<32x1xf32>
      %19 = tpu.reciprocal %18 {approx = true} : vector<32x1xf32> -> vector<32x1xf32>
      %c0_14 = arith.constant 0 : index
      %c0_15 = arith.constant 0 : index
      %20 = vector.load %arg3[%c0_14, %c0_15] : memref<32x16xf32, #tpu.memory_space<vmem>>, vector<32x16xf32>
      %c0_16 = arith.constant 0 : index
      %c0_17 = arith.constant 0 : index
      %21 = vector.load %arg5[%c0_16, %c0_17] : memref<16x256xf32, #tpu.memory_space<vmem>>, vector<16x256xf32>
      %cst_18 = arith.constant dense<0.000000e+00> : vector<32x256xf32>
      %22 = tpu.matmul %20, %21, %cst_18 {dimension_numbers = #tpu.dot_dimension_numbers<[1], [0], [0], [1], [0, 0, 1, 1], [], []>} : vector<32x16xf32>, vector<16x256xf32>, vector<32x256xf32> -> vector<32x256xf32>
      %23 = vector.extract_strided_slice %22 {offsets = [0, 0], sizes = [32, 128], strides = [1, 1]} : vector<32x256xf32> to vector<32x128xf32>
      %24 = vector.extract_strided_slice %22 {offsets = [0, 128], sizes = [32, 128], strides = [1, 1]} : vector<32x256xf32> to vector<32x128xf32>
      %25 = vector.broadcast %14 : vector<32x1xf32> to vector<32x128xf32>
      %26 = arith.mulf %25, %23 : vector<32x128xf32>
      %c0_19 = arith.constant 0 : index
      %c0_20 = arith.constant 0 : index
      %27 = vector.load %arg6[%c0_19, %c0_20] : memref<17x128xf32, #tpu.memory_space<vmem>>, vector<17x128xf32>
      %cst_21 = arith.constant dense<0.000000e+00> : vector<32x128xf32>
      %28 = tpu.matmul %13, %27, %cst_21 {dimension_numbers = #tpu.dot_dimension_numbers<[1], [0], [0], [1], [0, 0, 1, 1], [], []>} : vector<32x17xf32>, vector<17x128xf32>, vector<32x128xf32> -> vector<32x128xf32>
      %29 = arith.addf %26, %28 : vector<32x128xf32>
      %30 = vector.broadcast %19 : vector<32x1xf32> to vector<32x128xf32>
      %31 = arith.mulf %29, %30 : vector<32x128xf32>
      %c0_22 = arith.constant 0 : index
      %c0_23 = arith.constant 0 : index
      %32 = vector.load %arg7[%c0_22, %c0_23] : memref<1x128xf32, #tpu.memory_space<vmem>>, vector<1x128xf32>
      %33 = vector.broadcast %32 : vector<1x128xf32> to vector<32x128xf32>
      %34 = arith.addf %31, %33 : vector<32x128xf32>
      %c0_24 = arith.constant 0 : index
      %c0_25 = arith.constant 0 : index
      %35 = vector.load %arg8[%c0_24, %c0_25] : memref<1x128xf32, #tpu.memory_space<vmem>>, vector<1x128xf32>
      %36 = vector.broadcast %35 : vector<1x128xf32> to vector<32x128xf32>
      %37 = arith.addf %24, %36 : vector<32x128xf32>
      %38 = arith.subf %37, %34 : vector<32x128xf32>
      %39 = math.tanh %38 : vector<32x128xf32>
      %c0_26 = arith.constant 0 : index
      %c0_27 = arith.constant 0 : index
      %40 = vector.load %arg9[%c0_26, %c0_27] : memref<32x128xf32, #tpu.memory_space<vmem>>, vector<32x128xf32>
      tpu.vector_store %arg9[%c0_26, %c0_27], %39 {strides = array<i32>} : memref<32x128xf32, #tpu.memory_space<vmem>>, vector<32x128xf32>,
    } else {
    }
    return
  }
  func.func @transform_0(%arg0: i32, %arg1: i32) -> (i32, i32) {
    %c0_i32 = arith.constant 0 : i32
    return %arg0, %arg1 : i32, i32
  }
  func.func @transform_1(%arg0: i32, %arg1: i32) -> (i32, i32) {
    %c0_i32 = arith.constant 0 : i32
    %c0_i32_0 = arith.constant 0 : i32
    return %arg0, %c0_i32 : i32, i32
  }
  func.func @transform_2(%arg0: i32, %arg1: i32) -> (i32, i32) {
    %c0_i32 = arith.constant 0 : i32
    %c0_i32_0 = arith.constant 0 : i32
    return %arg1, %c0_i32 : i32, i32
  }
  func.func @transform_3(%arg0: i32, %arg1: i32) -> (i32, i32) {
    %c0_i32 = arith.constant 0 : i32
    %c0_i32_0 = arith.constant 0 : i32
    %c0_i32_1 = arith.constant 0 : i32
    return %c0_i32, %c0_i32_0 : i32, i32
  }
  func.func @transform_4(%arg0: i32, %arg1: i32) -> (i32, i32) {
    %c0_i32 = arith.constant 0 : i32
    %c0_i32_0 = arith.constant 0 : i32
    %c0_i32_1 = arith.constant 0 : i32
    return %c0_i32, %c0_i32_0 : i32, i32
  }
  func.func @transform_5(%arg0: i32, %arg1: i32) -> (i32, i32) {
    %c0_i32 = arith.constant 0 : i32
    %c0_i32_0 = arith.constant 0 : i32
    %c0_i32_1 = arith.constant 0 : i32
    return %c0_i32, %c0_i32_0 : i32, i32
  }
  func.func @transform_6(%arg0: i32, %arg1: i32) -> (i32, i32) {
    %c0_i32 = arith.constant 0 : i32
    %c0_i32_0 = arith.constant 0 : i32
    %c0_i32_1 = arith.constant 0 : i32
    return %c0_i32, %c0_i32_0 : i32, i32
  }
  func.func @transform_7(%arg0: i32, %arg1: i32) -> (i32, i32) {
    %c0_i32 = arith.constant 0 : i32
    %c0_i32_0 = arith.constant 0 : i32
    return %arg0, %c0_i32 : i32, i32
  }
}

</mosaic_0001>

<llo_original>
// kernel: graph_distill_operator.1
$region0: #{graph_distill_operator.1}
  #allocation0 [shape = 'u32[]', space=smem, size = 0x4, offset = 0x4, fixed_abs, tag = 'smem constant byte address 0x4 - core index']
  #allocation1 [shape = 'u32[144,128]{1,0:T(1,128)}', space=vmem, size = 0x12000, scoped, tag = 'internal scratch']
  #allocation2 [shape = 'f32[32,17]{1,0:T(8,128)}', space=vmem, size = 0x4000, scoped, tag = 'scratch operand']
  %s0 = inlined_call_operand.vmem [shape: s8[32,128], index: 0, kind: input, shape index: {}]
  %s1 = inlined_call_operand.vmem [shape: f32[32,16], index: 1, kind: input, shape index: {}]
  %s2 = inlined_call_operand.vmem [shape: bf16[128,17], index: 2, kind: input, shape index: {}]
  %s3 = inlined_call_operand.vmem [shape: f32[16,256], index: 3, kind: input, shape index: {}]
  %s4 = inlined_call_operand.vmem [shape: f32[17,128], index: 4, kind: input, shape index: {}]
  %s5 = inlined_call_operand.vmem [shape: f32[1,128], index: 5, kind: input, shape index: {}]
  %s6 = inlined_call_operand.vmem [shape: f32[1,128], index: 6, kind: input, shape index: {}]
  %s7 = inlined_call_operand.vmem [shape: f32[32,128], index: 7, kind: output, shape index: {}]
  %s8 = sld [smem:[#allocation0]]
  $region46: #{graph_distill_operator.1} parent=0
    _
  %s10 = ssub.s32 1, %s8
  %s11 = scalar_select 0, %s10, %s8
  // Predicated region
  $region2: #{graph_distill_operator.1} parent=0 // pred_check
    _
  $region3: #{graph_distill_operator.1} parent=0 // pred_check_branch
    %13 = sbr.rel (0) target = $region5
  $region4: #{graph_distill_operator.1} parent=0 // pred_region
    _
  $region5: #{graph_distill_operator.1} parent=0 // pred_fallthru
    _
  // Predicated region
  $region6: #{graph_distill_operator.1} parent=0 // pred_check
    _
  $region7: #{graph_distill_operator.1} parent=0 // pred_check_branch
    %15 = sbr.rel (0) target = $region9
  $region8: #{graph_distill_operator.1} parent=0 // pred_region
    _
  $region9: #{graph_distill_operator.1} parent=0 // pred_fallthru
    _
  // Predicated region
  $region10: #{graph_distill_operator.1} parent=0 // pred_check
    _
  $region11: #{graph_distill_operator.1} parent=0 // pred_check_branch
    %17 = sbr.rel (0) target = $region13
  $region12: #{graph_distill_operator.1} parent=0 // pred_region
    _
  $region13: #{graph_distill_operator.1} parent=0 // pred_fallthru
    _
  // Predicated region
  $region14: #{graph_distill_operator.1} parent=0 // pred_check
    _
  $region15: #{graph_distill_operator.1} parent=0 // pred_check_branch
    %19 = sbr.rel (0) target = $region17
  $region16: #{graph_distill_operator.1} parent=0 // pred_region
    _
  $region17: #{graph_distill_operator.1} parent=0 // pred_fallthru
    _
  // Predicated region
  $region18: #{graph_distill_operator.1} parent=0 // pred_check
    _
  $region19: #{graph_distill_operator.1} parent=0 // pred_check_branch
    %21 = sbr.rel (0) target = $region21
  $region20: #{graph_distill_operator.1} parent=0 // pred_region
    _
  $region21: #{graph_distill_operator.1} parent=0 // pred_fallthru
    _
  // Predicated region
  $region22: #{graph_distill_operator.1} parent=0 // pred_check
    _
  $region23: #{graph_distill_operator.1} parent=0 // pred_check_branch
    %23 = sbr.rel (0) target = $region25
  $region24: #{graph_distill_operator.1} parent=0 // pred_region
    _
  $region25: #{graph_distill_operator.1} parent=0 // pred_fallthru
    _
  // Predicated region
  $region26: #{graph_distill_operator.1} parent=0 // pred_check
    _
  $region27: #{graph_distill_operator.1} parent=0 // pred_check_branch
    %25 = sbr.rel (0) target = $region29
  $region28: #{graph_distill_operator.1} parent=0 // pred_region
    _
  $region29: #{graph_distill_operator.1} parent=0 // pred_fallthru
    _
  %p27 = scmp.eq.s32.totalorder 0, 0
  // Predicated region
  $region30: #{graph_distill_operator.1} parent=0 // pred_check
    %p28 = pneg %p27
  $region31: #{graph_distill_operator.1} parent=0 // pred_check_branch
    %30 = sbr.rel (%p28) target = $region33
  $region32: #{graph_distill_operator.1} parent=0 // pred_region
    %vm31 = vcmask 138240
    %32 = vst.msk [vmem:[#allocation2] sm:$0xff] %vm31, 0.0
    %33 = vst.msk [vmem:[#allocation2 + $0x8] sm:$0xff] %vm31, 0.0
    %34 = vst.msk [vmem:[#allocation2 + $0x10] sm:$0xff] %vm31, 0.0
    %35 = vst.msk [vmem:[#allocation2 + $0x18] sm:$0xff] %vm31, 0.0
  $region33: #{graph_distill_operator.1} parent=0 // pred_fallthru
    _
  %v36 = vld [vmem:[%s0] sm:$0xff]
  %v37 = vunpack.c.l.s8.bf16 %v36
  %v38 = vunpack.c.h.s8.bf16 %v36
  %v39 = vld [vmem:[#allocation2] sm:$0xff]
  %v40 = vld [vmem:[#allocation2 + $0x8] sm:$0xff]
  %v41 = vld [vmem:[#allocation2 + $0x10] sm:$0xff]
  %v42 = vld [vmem:[#allocation2 + $0x18] sm:$0xff]
  %v43 = vld [vmem:[%s2] sm:$0xf]
  %v44 = vld [vmem:[%s2 + $0x4] sm:$0xf]
  %v45 = vld [vmem:[%s2 + $0x8] sm:$0xf]
  %v46 = vld [vmem:[%s2 + $0xc] sm:$0xf]
  %v47 = vld [vmem:[%s2 + $0x10] sm:$0xf]
  %v48 = vld [vmem:[%s2 + $0x14] sm:$0xf]
  %v49 = vld [vmem:[%s2 + $0x18] sm:$0xf]
  %v50 = vld [vmem:[%s2 + $0x1c] sm:$0xf]
  %v51 = vld [vmem:[%s2 + $0x20] sm:$0xf]
  %v52 = vld [vmem:[%s2 + $0x24] sm:$0xf]
  %v53 = vld [vmem:[%s2 + $0x28] sm:$0xf]
  %v54 = vld [vmem:[%s2 + $0x2c] sm:$0xf]
  %v55 = vld [vmem:[%s2 + $0x30] sm:$0xf]
  %v56 = vld [vmem:[%s2 + $0x34] sm:$0xf]
  %v57 = vld [vmem:[%s2 + $0x38] sm:$0xf]
  %v58 = vld [vmem:[%s2 + $0x3c] sm:$0xf]
  %v75 = vunpack.c.l.b16 %v43
  %v76 = vunpack.c.l.b16 %v44
  %v77 = vunpack.c.l.b16 %v45
  %v78 = vunpack.c.l.b16 %v46
  %v79 = vunpack.c.l.b16 %v47
  %v80 = vunpack.c.l.b16 %v48
  %v81 = vunpack.c.l.b16 %v49
  %v82 = vunpack.c.l.b16 %v50
  %v83 = vunpack.c.l.b16 %v51
  %v84 = vunpack.c.l.b16 %v52
  %v85 = vunpack.c.l.b16 %v53
  %v86 = vunpack.c.l.b16 %v54
  %v87 = vunpack.c.l.b16 %v55
  %v88 = vunpack.c.l.b16 %v56
  %v89 = vunpack.c.l.b16 %v57
  %v90 = vunpack.c.l.b16 %v58
  %v91 = vpack.c.b16 %v76, %v75
  %v92 = vpack.c.b16 %v78, %v77
  %v93 = vpack.c.b16 %v80, %v79
  %v94 = vpack.c.b16 %v82, %v81
  %v95 = vpack.c.b16 %v84, %v83
  %v96 = vpack.c.b16 %v86, %v85
  %v97 = vpack.c.b16 %v88, %v87
  %v98 = vpack.c.b16 %v90, %v89
  %107 = vmatprep.subr.bf16.mxu0 0
  %108 = vmatpush1.bf16.msra.mxu0 %v91
  %109 = vmatprep.subr.bf16.mxu0 0
  %110 = vmatpush1.bf16.msra.mxu0 %v92
  %111 = vmatprep.subr.bf16.mxu0 0
  %112 = vmatpush1.bf16.msra.mxu0 %v93
  %113 = vmatprep.subr.bf16.mxu0 0
  %114 = vmatpush1.bf16.msra.mxu0 %v94
  %115 = vmatprep.subr.bf16.mxu0 0
  %116 = vmatpush1.bf16.msra.mxu0 %v95
  %117 = vmatprep.subr.bf16.mxu0 0
  %118 = vmatpush1.bf16.msra.mxu0 %v96
  %119 = vmatprep.subr.bf16.mxu0 0
  %120 = vmatpush1.bf16.msra.mxu0 %v97
  %121 = vmatprep.subr.bf16.mxu0 0
  %122 = vmatpush1.bf16.msra.mxu0 %v98
  %123 = vmatprep.subr.bf16.mxu0 0
  %124 = vmatpush1.bf16.msra.mxu0 0
  %125 = vmatprep.subr.bf16.mxu0 0
  %126 = vmatpush1.bf16.msra.mxu0 0
  %127 = vmatprep.subr.bf16.mxu0 0
  %128 = vmatpush1.bf16.msra.mxu0 0
  %129 = vmatprep.subr.bf16.mxu0 0
  %130 = vmatpush1.bf16.msra.mxu0 0
  %131 = vmatprep.subr.bf16.mxu0 0
  %132 = vmatpush1.bf16.msra.mxu0 0
  %133 = vmatprep.subr.bf16.mxu0 0
  %134 = vmatpush1.bf16.msra.mxu0 0
  %135 = vmatprep.subr.bf16.mxu0 0
  %136 = vmatpush1.bf16.msra.mxu0 0
  %137 = vmatprep.subr.bf16.mxu0 0
  %138 = vmatpush1.bf16.msra.mxu0 0
  %139 = vmatprep.mubr.bf16.mxu0 0
  %140 = vmatmul.mubr.bf16.gmra.mrb[0].mxu0 %v37
  %v141 = vpop.f32.mrb[0].mxu0
  %v142 = vadd.f32 0.0, %v141
  %v143 = vpop.f32.mrb[0].mxu0
  %v144 = vpop.f32.mrb[0].mxu0
  %v145 = vadd.f32 0.0, %v144
  %v146 = vpop.f32.mrb[0].mxu0
  %147 = vmatprep.mubr.bf16.mxu0 0
  %148 = vmatmul.mubr.bf16.gmra.mrb[0].mxu0 %v38
  %v149 = vpop.f32.mrb[0].mxu0
  %v150 = vadd.f32 0.0, %v149
  %v151 = vpop.f32.mrb[0].mxu0
  %v152 = vpop.f32.mrb[0].mxu0
  %v153 = vadd.f32 0.0, %v152
  %v154 = vpop.f32.mrb[0].mxu0
  %155 = vdwg.mxu0
  %v156 = vadd.f32 %v39, %v142
  %v157 = vadd.f32 %v40, %v145
  %v158 = vadd.f32 %v41, %v150
  %v159 = vadd.f32 %v42, %v153
  %vm160 = vcmask 138240
  %161 = vst.msk [vmem:[#allocation2] sm:$0xff] %vm160, %v156
  %162 = vst.msk [vmem:[#allocation2 + $0x8] sm:$0xff] %vm160, %v157
  %163 = vst.msk [vmem:[#allocation2 + $0x10] sm:$0xff] %vm160, %v158
  %164 = vst.msk [vmem:[#allocation2 + $0x18] sm:$0xff] %vm160, %v159
  // Predicated region
  $region34: #{graph_distill_operator.1} parent=0 // pred_check
    %p165 = pneg %p27
  $region35: #{graph_distill_operator.1} parent=0 // pred_check_branch
    %167 = sbr.rel (%p165) target = $region37
  $region36: #{graph_distill_operator.1} parent=0 // pred_region
    %v168 = vld [vmem:[#allocation2] sm:$0xff]
    %v169 = vld [vmem:[#allocation2 + $0x8] sm:$0xff]
    %v170 = vld [vmem:[#allocation2 + $0x10] sm:$0xff]
    %v171 = vld [vmem:[#allocation2 + $0x18] sm:$0xff]
    %vm172 = vcmp.gt.f32.partialorder %v168, 0.0
    %vm173 = vcmp.gt.f32.partialorder %v169, 0.0
    %vm174 = vcmp.gt.f32.partialorder %v170, 0.0
    %vm175 = vcmp.gt.f32.partialorder %v171, 0.0
    %v176 = vsel %vm172, %v168, 1.0
    %v177 = vsel %vm173, %v169, 1.0
    %v178 = vsel %vm174, %v170, 1.0
    %v179 = vsel %vm175, %v171, 1.0
    %v180 = vrcp.pop %v176
    %v181 = vrcp.pop %v177
    %v182 = vrcp.pop %v178
    %v183 = vrcp.pop %v179
    %v184 = vld [vmem:[%s1] sm:$0xff]
    %v185 = vld [vmem:[%s1 + $0x8] sm:$0xff]
    %v186 = vld [vmem:[%s1 + $0x10] sm:$0xff]
    %v187 = vld [vmem:[%s1 + $0x18] sm:$0xff]
    %v188 = vld [vmem:[%s3] sm:$0xff]
    %v189 = vld [vmem:[%s3 + $0x8] sm:$0xff]
    %v190 = vld [vmem:[%s3 + $0x10] sm:$0xff]
    %v191 = vld [vmem:[%s3 + $0x18] sm:$0xff]
    %vm192 = vcmask 130048
    %v194 = vsel %vm192, %v184, 0
    %v197 = vsel %vm192, %v185, 0
    %v200 = vsel %vm192, %v186, 0
    %v203 = vsel %vm192, %v187, 0
    %205 = vmatprep.subr.mxu0 %v189
    %206 = vmatpush1.msra.mxu0 %v188
    %207 = vmatprep.subr.mxu0 %v191
    %208 = vmatpush1.msra.mxu0 %v190
    %209 = vmatprep.subr.mxu0 0.0
    %210 = vmatpush1.msra.mxu0 0.0
    %211 = vmatprep.subr.mxu0 0.0
    %212 = vmatpush1.msra.mxu0 0.0
    %213 = vmatprep.subr.mxu0 0.0
    %214 = vmatpush1.msra.mxu0 0.0
    %215 = vmatprep.subr.mxu0 0.0
    %216 = vmatpush1.msra.mxu0 0.0
    %217 = vmatprep.subr.mxu0 0.0
    %218 = vmatpush1.msra.mxu0 0.0
    %219 = vmatprep.subr.mxu0 0.0
    %220 = vmatpush1.msra.mxu0 0.0
    %221 = vmatprep.subr.mxu0 0.0
    %222 = vmatpush1.msra.mxu0 0.0
    %223 = vmatprep.subr.mxu0 0.0
    %224 = vmatpush1.msra.mxu0 0.0
    %225 = vmatprep.subr.mxu0 0.0
    %226 = vmatpush1.msra.mxu0 0.0
    %227 = vmatprep.subr.mxu0 0.0
    %228 = vmatpush1.msra.mxu0 0.0
    %229 = vmatprep.subr.mxu0 0.0
    %230 = vmatpush1.msra.mxu0 0.0
    %231 = vmatprep.subr.mxu0 0.0
    %232 = vmatpush1.msra.mxu0 0.0
    %233 = vmatprep.subr.mxu0 0.0
    %234 = vmatpush1.msra.mxu0 0.0
    %235 = vmatprep.subr.mxu0 0.0
    %236 = vmatpush1.msra.mxu0 0.0
    %237 = vmatprep.subr.mxu0 0.0
    %238 = vmatpush1.msra.mxu0 0.0
    %239 = vmatprep.subr.mxu0 0.0
    %240 = vmatpush1.msra.mxu0 0.0
    %241 = vmatprep.subr.mxu0 0.0
    %242 = vmatpush1.msra.mxu0 0.0
    %243 = vmatprep.subr.mxu0 0.0
    %244 = vmatpush1.msra.mxu0 0.0
    %245 = vmatprep.subr.mxu0 0.0
    %246 = vmatpush1.msra.mxu0 0.0
    %247 = vmatprep.subr.mxu0 0.0
    %248 = vmatpush1.msra.mxu0 0.0
    %249 = vmatprep.subr.mxu0 0.0
    %250 = vmatpush1.msra.mxu0 0.0
    %251 = vmatprep.subr.mxu0 0.0
    %252 = vmatpush1.msra.mxu0 0.0
    %253 = vmatprep.subr.mxu0 0.0
    %254 = vmatpush1.msra.mxu0 0.0
    %255 = vmatprep.subr.mxu0 0.0
    %256 = vmatpush1.msra.mxu0 0.0
    %257 = vmatprep.subr.mxu0 0.0
    %258 = vmatpush1.msra.mxu0 0.0
    %259 = vmatprep.subr.mxu0 0.0
    %260 = vmatpush1.msra.mxu0 0.0
    %261 = vmatprep.subr.mxu0 0.0
    %262 = vmatpush1.msra.mxu0 0.0
    %263 = vmatprep.subr.mxu0 0.0
    %264 = vmatpush1.msra.mxu0 0.0
    %265 = vmatprep.subr.mxu0 0.0
    %266 = vmatpush1.msra.mxu0 0.0
    %267 = vmatprep.subr.mxu0 0.0
    %268 = vmatpush1.msra.mxu0 0.0
    %269 = vmatprep.mubr.f32.mxu0 0.0
    %270 = vmatmul.mubr.f32.gmra.mrb[0].mxu0 %v194
    %v271 = vpop.f32.mrb[0].mxu0
    %v272 = vadd.f32 0.0, %v271
    %v273 = vpop.f32.mrb[0].mxu0
    %v274 = vadd.f32 0.0, %v273
    %275 = vmatprep.mubr.f32.mxu0 0.0
    %276 = vmatmul.mubr.f32.gmra.mrb[0].mxu0 %v197
    %v277 = vpop.f32.mrb[0].mxu0
    %v278 = vadd.f32 0.0, %v277
    %v279 = vpop.f32.mrb[0].mxu0
    %v280 = vadd.f32 0.0, %v279
    %281 = vmatprep.mubr.f32.mxu0 0.0
    %282 = vmatmul.mubr.f32.gmra.mrb[0].mxu0 %v200
    %v283 = vpop.f32.mrb[0].mxu0
    %v284 = vadd.f32 0.0, %v283
    %v285 = vpop.f32.mrb[0].mxu0
    %v286 = vadd.f32 0.0, %v285
    %287 = vmatprep.mubr.f32.mxu0 0.0
    %288 = vmatmul.mubr.f32.gmra.mrb[0].mxu0 %v203
    %v289 = vpop.f32.mrb[0].mxu0
    %v290 = vadd.f32 0.0, %v289
    %v291 = vpop.f32.mrb[0].mxu0
    %v292 = vadd.f32 0.0, %v291
    %293 = vdwg.mxu0
    %295 = vset.pattern.permute.xlu0 16
    %296 = vperm.xlu0 %295, %v168
    %v297 = vpop.permute.xlu0 %296
    %300 = vset.pattern.permute.xlu0 16
    %301 = vperm.xlu0 %300, %v169
    %v302 = vpop.permute.xlu0 %301
    %305 = vset.pattern.permute.xlu0 16
    %306 = vperm.xlu0 %305, %v170
    %v307 = vpop.permute.xlu0 %306
    %310 = vset.pattern.permute.xlu0 16
    %311 = vperm.xlu0 %310, %v171
    %v312 = vpop.permute.xlu0 %311
    %v314 = vmul.f32 %v297, %v272
    %v315 = vmul.f32 %v302, %v278
    %v316 = vmul.f32 %v307, %v284
    %v317 = vmul.f32 %v312, %v290
    %v318 = vld [vmem:[%s4] sm:$0xff]
    %v319 = vld [vmem:[%s4 + $0x8] sm:$0xff]
    %v320 = vld [vmem:[%s4 + $0x10] sm:$0x1]
    %v321 = vsel %vm160, %v168, 0
    %v323 = vsel %vm160, %v169, 0
    %v325 = vsel %vm160, %v170, 0
    %v327 = vsel %vm160, %v171, 0
    %vm329 = vcmask 1040384
    %v331 = vsel %vm329, %v320, 0
    %333 = vmatprep.subr.mxu0 0.0
    %334 = vmatpush1.msra.mxu0 %v318
    %335 = vmatprep.subr.mxu0 0.0
    %336 = vmatpush1.msra.mxu0 %v319
    %337 = vmatprep.subr.mxu0 0.0
    %338 = vmatpush1.msra.mxu0 %v331
    %339 = vmatprep.subr.mxu0 0.0
    %340 = vmatpush1.msra.mxu0 0.0
    %341 = vmatprep.subr.mxu0 0.0
    %342 = vmatpush1.msra.mxu0 0.0
    %343 = vmatprep.subr.mxu0 0.0
    %344 = vmatpush1.msra.mxu0 0.0
    %345 = vmatprep.subr.mxu0 0.0
    %346 = vmatpush1.msra.mxu0 0.0
    %347 = vmatprep.subr.mxu0 0.0
    %348 = vmatpush1.msra.mxu0 0.0
    %349 = vmatprep.subr.mxu0 0.0
    %350 = vmatpush1.msra.mxu0 0.0
    %351 = vmatprep.subr.mxu0 0.0
    %352 = vmatpush1.msra.mxu0 0.0
    %353 = vmatprep.subr.mxu0 0.0
    %354 = vmatpush1.msra.mxu0 0.0
    %355 = vmatprep.subr.mxu0 0.0
    %356 = vmatpush1.msra.mxu0 0.0
    %357 = vmatprep.subr.mxu0 0.0
    %358 = vmatpush1.msra.mxu0 0.0
    %359 = vmatprep.subr.mxu0 0.0
    %360 = vmatpush1.msra.mxu0 0.0
    %361 = vmatprep.subr.mxu0 0.0
    %362 = vmatpush1.msra.mxu0 0.0
    %363 = vmatprep.subr.mxu0 0.0
    %364 = vmatpush1.msra.mxu0 0.0
    %365 = vmatprep.subr.mxu0 0.0
    %366 = vmatpush1.msra.mxu0 0.0
    %367 = vmatprep.subr.mxu0 0.0
    %368 = vmatpush1.msra.mxu0 0.0
    %369 = vmatprep.subr.mxu0 0.0
    %370 = vmatpush1.msra.mxu0 0.0
    %371 = vmatprep.subr.mxu0 0.0
    %372 = vmatpush1.msra.mxu0 0.0
    %373 = vmatprep.subr.mxu0 0.0
    %374 = vmatpush1.msra.mxu0 0.0
    %375 = vmatprep.subr.mxu0 0.0
    %376 = vmatpush1.msra.mxu0 0.0
    %377 = vmatprep.subr.mxu0 0.0
    %378 = vmatpush1.msra.mxu0 0.0
    %379 = vmatprep.subr.mxu0 0.0
    %380 = vmatpush1.msra.mxu0 0.0
    %381 = vmatprep.subr.mxu0 0.0
    %382 = vmatpush1.msra.mxu0 0.0
    %383 = vmatprep.subr.mxu0 0.0
    %384 = vmatpush1.msra.mxu0 0.0
    %385 = vmatprep.subr.mxu0 0.0
    %386 = vmatpush1.msra.mxu0 0.0
    %387 = vmatprep.subr.mxu0 0.0
    %388 = vmatpush1.msra.mxu0 0.0
    %389 = vmatprep.subr.mxu0 0.0
    %390 = vmatpush1.msra.mxu0 0.0
    %391 = vmatprep.subr.mxu0 0.0
    %392 = vmatpush1.msra.mxu0 0.0
    %393 = vmatprep.subr.mxu0 0.0
    %394 = vmatpush1.msra.mxu0 0.0
    %395 = vmatprep.subr.mxu0 0.0
    %396 = vmatpush1.msra.mxu0 0.0
    %397 = vmatprep.mubr.f32.mxu0 0.0
    %398 = vmatmul.mubr.f32.gmra.mrb[0].mxu0 %v321
    %v399 = vpop.f32.mrb[0].mxu0
    %v400 = vadd.f32 0.0, %v399
    %v401 = vpop.f32.mrb[0].mxu0
    %402 = vmatprep.mubr.f32.mxu0 0.0
    %403 = vmatmul.mubr.f32.gmra.mrb[0].mxu0 %v323
    %v404 = vpop.f32.mrb[0].mxu0
    %v405 = vadd.f32 0.0, %v404
    %v406 = vpop.f32.mrb[0].mxu0
    %407 = vmatprep.mubr.f32.mxu0 0.0
    %408 = vmatmul.mubr.f32.gmra.mrb[0].mxu0 %v325
    %v409 = vpop.f32.mrb[0].mxu0
    %v410 = vadd.f32 0.0, %v409
    %v411 = vpop.f32.mrb[0].mxu0
    %412 = vmatprep.mubr.f32.mxu0 0.0
    %413 = vmatmul.mubr.f32.gmra.mrb[0].mxu0 %v327
    %v414 = vpop.f32.mrb[0].mxu0
    %v415 = vadd.f32 0.0, %v414
    %v416 = vpop.f32.mrb[0].mxu0
    %417 = vdwg.mxu0
    %v418 = vadd.f32 %v314, %v400
    %v419 = vadd.f32 %v315, %v405
    %v420 = vadd.f32 %v316, %v410
    %v421 = vadd.f32 %v317, %v415
    %423 = vset.pattern.permute.xlu0 16
    %424 = vperm.xlu0 %423, %v180
    %v425 = vpop.permute.xlu0 %424
    %428 = vset.pattern.permute.xlu0 16
    %429 = vperm.xlu0 %428, %v181
    %v430 = vpop.permute.xlu0 %429
    %433 = vset.pattern.permute.xlu0 16
    %434 = vperm.xlu0 %433, %v182
    %v435 = vpop.permute.xlu0 %434
    %438 = vset.pattern.permute.xlu0 16
    %439 = vperm.xlu0 %438, %v183
    %v440 = vpop.permute.xlu0 %439
    %v442 = vmul.f32 %v418, %v425
    %v443 = vmul.f32 %v419, %v430
    %v444 = vmul.f32 %v420, %v435
    %v445 = vmul.f32 %v421, %v440
    %v446 = vld [vmem:[%s5] sm:$0x1]
    %v448 = vlaneseq
    %v449 = vshrl.u32 %v448, 7
    %v450 = vsub.s32 0, %v449
    %v451 = vrot.slane %v446, %v450
    %v453 = vadd.f32 %v442, %v451
    %v454 = vadd.f32 %v443, %v451
    %v455 = vadd.f32 %v444, %v451
    %v456 = vadd.f32 %v445, %v451
    %v457 = vld [vmem:[%s6] sm:$0x1]
    %v459 = vlaneseq
    %v460 = vshrl.u32 %v459, 7
    %v461 = vsub.s32 0, %v460
    %v462 = vrot.slane %v457, %v461
    %v464 = vadd.f32 %v274, %v462
    %v465 = vadd.f32 %v280, %v462
    %v466 = vadd.f32 %v286, %v462
    %v467 = vadd.f32 %v292, %v462
    %v468 = vsub.f32 %v464, %v453
    %v469 = vsub.f32 %v465, %v454
    %v470 = vsub.f32 %v466, %v455
    %v471 = vsub.f32 %v467, %v456
    %v472 = vtanh.pop %v468
    %v473 = vtanh.pop %v469
    %v474 = vtanh.pop %v470
    %v475 = vtanh.pop %v471
    %476 = vst [vmem:[%s7] sm:$0xff] %v472
    %477 = vst [vmem:[%s7 + $0x8] sm:$0xff] %v473
    %478 = vst [vmem:[%s7 + $0x10] sm:$0xff] %v474
    %479 = vst [vmem:[%s7 + $0x18] sm:$0xff] %v475
  $region37: #{graph_distill_operator.1} parent=0 // pred_fallthru
    _
  // Predicated region
  $region38: #{graph_distill_operator.1} parent=0 // pred_check
    _
  $region39: #{graph_distill_operator.1} parent=0 // pred_check_branch
    %481 = sbr.rel (0) target = $region41
  $region40: #{graph_distill_operator.1} parent=0 // pred_region
    _
  $region41: #{graph_distill_operator.1} parent=0 // pred_fallthru
    _
  // Predicated region
  $region42: #{graph_distill_operator.1} parent=0 // pred_check
    _
  $region43: #{graph_distill_operator.1} parent=0 // pred_check_branch
    %483 = sbr.rel (0) target = $region45
  $region44: #{graph_distill_operator.1} parent=0 // pred_region
    _
  $region45: #{graph_distill_operator.1} parent=0 // pred_fallthru
    _

</llo_original>
